<compile_context>
chip_gen: v6e
topology: v6e:2x2x1
jax: 0.10.0
libtpu: 0.0.40
codegen_flags: <defaults>
</compile_context>

<pallas_src>
import jax
import jax.numpy as jnp
from jax.experimental import pallas as pl
from jax.experimental.pallas import tpu as pltpu

LANES = 128
MAX_TILE_ROWS = 1024  # rows of 128 lanes per grid step; multiple of 8


def _rmse_partial_kernel(yhat_ref, y_ref, o_ref):
    """Accumulate per-lane/sublane partial sums of squared differences.

    yhat_ref / y_ref: (tile_rows // 8, 8, LANES) block of the inputs.
    o_ref:            (8, LANES) f32 output block, revisited (accumulated)
                      across the inner "arbitrary" grid axis.
    """
    # Zero the resident output/accumulator block on the first inner step.
    @pl.when(pl.program_id(1) == 0)
    def _():
        o_ref[...] = jnp.zeros_like(o_ref)

    d = yhat_ref[...].astype(jnp.float32) - y_ref[...].astype(jnp.float32)
    # Sum over the leading (vreg-count) axis: pure elementwise VPU adds.
    o_ref[...] += jnp.sum(d * d, axis=0)


def rmse_loss(yhat, y):
    """RMSE = sqrt(mean((yhat - y)**2)) over all elements (PyTorch MSELoss default)."""
    assert yhat.shape == y.shape, "shapes must match (no broadcasting in MSELoss default path)"
    n = int(yhat.size)
    if n == 0:
        # PyTorch: mean over an empty tensor -> nan.
        return jnp.float32(jnp.nan)

    flat_yhat = jnp.ravel(yhat)
    flat_y = jnp.ravel(y)

    rows_total = n // LANES
    tile_rows = min(MAX_TILE_ROWS, (rows_total // 8) * 8)

    ssq = jnp.float32(0.0)
    main_elems = 0

    if tile_rows >= 8:
        num_tiles = rows_total // tile_rows
        # Split across the two TensorCores on v7x when evenly possible.
        num_outer = 2 if (num_tiles >= 2 and num_tiles % 2 == 0) else 1
        num_inner = num_tiles // num_outer
        main_rows = num_tiles * tile_rows
        main_elems = main_rows * LANES

        # Exactly-divisible prefix; avoid any slice/copy in the common case
        # where the whole array is covered.
        yhat_main = flat_yhat if main_elems == n else flat_yhat[:main_elems]
        y_main = flat_y if main_elems == n else flat_y[:main_elems]
        # (rows/8, 8, 128): last two dims are one f32 vreg tile -> layout-clean
        # blocks and a pure-VPU axis-0 reduction inside the kernel.
        yhat3d = yhat_main.reshape(main_rows // 8, 8, LANES)
        y3d = y_main.reshape(main_rows // 8, 8, LANES)

        tile_sub = tile_rows // 8
        in_map = lambda o, i: (o * num_inner + i, 0, 0)  # noqa: E731

        partials = pl.pallas_call(
            _rmse_partial_kernel,
            out_shape=jax.ShapeDtypeStruct((num_outer * 8, LANES), jnp.float32),
            grid_spec=pltpu.PrefetchScalarGridSpec(
                num_scalar_prefetch=0,
                grid=(num_outer, num_inner),
                in_specs=[
                    pl.BlockSpec((tile_sub, 8, LANES), in_map),
                    pl.BlockSpec((tile_sub, 8, LANES), in_map),
                ],
                # One (8, 128) partial-sum block per outer (per-core) slice;
                # constant across the inner axis -> stays resident in VMEM.
                out_specs=pl.BlockSpec((8, LANES), lambda o, i: (o, 0)),
            ),
            compiler_params=pltpu.CompilerParams(
                dimension_semantics=("parallel", "arbitrary"),
                vmem_limit_bytes=32 * 1024 * 1024,
            ),
        )(yhat3d, y3d)

        ssq = jnp.sum(partials)

    # Tail (elements not covered by whole tiles) in plain JAX: always smaller
    # than one tile (< MAX_TILE_ROWS*128 + 128 elements), so it is cheap.
    if main_elems < n:
        d_tail = (flat_yhat[main_elems:].astype(jnp.float32)
                  - flat_y[main_elems:].astype(jnp.float32))
        ssq = ssq + jnp.sum(d_tail * d_tail)

    return jnp.sqrt(ssq / jnp.float32(n))


if __name__ == "__main__":
    key = jax.random.PRNGKey(0)
    k1, k2 = jax.random.split(key)
    # Small NCHW prediction/target pair.
    yhat = jax.random.normal(k1, (2, 4, 16, 16), dtype=jnp.float32)
    y = jax.random.normal(k2, (2, 4, 16, 16), dtype=jnp.float32)

    loss = rmse_loss(yhat, y)
    jax.block_until_ready(loss)

    # Reference check in plain JAX.
    ref = jnp.sqrt(jnp.mean((yhat - y) ** 2))
    assert jnp.allclose(loss, ref, rtol=1e-5, atol=1e-6), (loss, ref)
    print("KERNEL_OK")
</pallas_src>

<mosaic_0001>
module attributes {stable_mosaic.version = 11 : i64} {
  func.func @_rmse_partial_kernel(%arg0: i32, %arg1: i32, %arg2: memref<2x8x128xf32, #tpu.memory_space<vmem>>, %arg3: memref<2x8x128xf32, #tpu.memory_space<vmem>>, %arg4: memref<8x128xf32, #tpu.memory_space<vmem>>) attributes {dimension_semantics = [#tpu.dimension_semantics<parallel>, #tpu.dimension_semantics<arbitrary>], iteration_bounds = array<i64: 1, 1>, scalar_prefetch = 0 : i64, scratch_operands = 0 : i64, tpu.core_type = #tpu.core_type<tc>, window_params = [{transform_indices = @transform_0, window_bounds = array<i64: 2, 8, 128>}, {transform_indices = @transform_1, window_bounds = array<i64: 2, 8, 128>}, {transform_indices = @transform_2, window_bounds = array<i64: 8, 128>}]} {
    %c0_i32 = arith.constant 0 : i32
    %0 = arith.cmpi eq, %arg1, %c0_i32 : i32
    %1 = arith.extui %0 : i1 to i32
    %c0_i32_0 = arith.constant 0 : i32
    %2 = arith.cmpi ne, %1, %c0_i32_0 : i32
    scf.if %2 {
      %cst_10 = arith.constant 0.000000e+00 : f32
      %11 = vector.broadcast %cst_10 : f32 to vector<8x128xf32>
      %c0_11 = arith.constant 0 : index
      %c0_12 = arith.constant 0 : index
      %12 = vector.load %arg4[%c0_11, %c0_12] : memref<8x128xf32, #tpu.memory_space<vmem>>, vector<8x128xf32>
      tpu.vector_store %arg4[%c0_11, %c0_12], %11 {strides = array<i32>} : memref<8x128xf32, #tpu.memory_space<vmem>>, vector<8x128xf32>,
    } else {
    }
    %c0 = arith.constant 0 : index
    %c0_1 = arith.constant 0 : index
    %c0_2 = arith.constant 0 : index
    %3 = vector.load %arg2[%c0, %c0_1, %c0_2] : memref<2x8x128xf32, #tpu.memory_space<vmem>>, vector<2x8x128xf32>
    %c0_3 = arith.constant 0 : index
    %c0_4 = arith.constant 0 : index
    %c0_5 = arith.constant 0 : index
    %4 = vector.load %arg3[%c0_3, %c0_4, %c0_5] : memref<2x8x128xf32, #tpu.memory_space<vmem>>, vector<2x8x128xf32>
    %5 = arith.subf %3, %4 : vector<2x8x128xf32>
    %c0_6 = arith.constant 0 : index
    %c0_7 = arith.constant 0 : index
    %6 = vector.load %arg4[%c0_6, %c0_7] : memref<8x128xf32, #tpu.memory_space<vmem>>, vector<8x128xf32>
    %7 = arith.mulf %5, %5 : vector<2x8x128xf32>
    %cst = arith.constant dense<0.000000e+00> : vector<8x128xf32>
    %8 = vector.multi_reduction <add>, %7, %cst [0] : vector<2x8x128xf32> to vector<8x128xf32>
    %9 = arith.addf %6, %8 : vector<8x128xf32>
    %c0_8 = arith.constant 0 : index
    %c0_9 = arith.constant 0 : index
    %10 = vector.load %arg4[%c0_8, %c0_9] : memref<8x128xf32, #tpu.memory_space<vmem>>, vector<8x128xf32>
    tpu.vector_store %arg4[%c0_8, %c0_9], %9 {strides = array<i32>} : memref<8x128xf32, #tpu.memory_space<vmem>>, vector<8x128xf32>,
    return
  }
  func.func @transform_0(%arg0: i32, %arg1: i32) -> (i32, i32, i32) {
    %c1_i32 = arith.constant 1 : i32
    %0 = arith.muli %arg0, %c1_i32 : i32
    %1 = arith.addi %0, %arg1 : i32
    %c0_i32 = arith.constant 0 : i32
    %c0_i32_0 = arith.constant 0 : i32
    %c0_i32_1 = arith.constant 0 : i32
    return %1, %c0_i32, %c0_i32_0 : i32, i32, i32
  }
  func.func @transform_1(%arg0: i32, %arg1: i32) -> (i32, i32, i32) {
    %c1_i32 = arith.constant 1 : i32
    %0 = arith.muli %arg0, %c1_i32 : i32
    %1 = arith.addi %0, %arg1 : i32
    %c0_i32 = arith.constant 0 : i32
    %c0_i32_0 = arith.constant 0 : i32
    %c0_i32_1 = arith.constant 0 : i32
    return %1, %c0_i32, %c0_i32_0 : i32, i32, i32
  }
  func.func @transform_2(%arg0: i32, %arg1: i32) -> (i32, i32) {
    %c0_i32 = arith.constant 0 : i32
    %c0_i32_0 = arith.constant 0 : i32
    return %arg0, %c0_i32 : i32, i32
  }
}

</mosaic_0001>

<llo_original>
// kernel: tpu_custom_call.1
$region0: #{tpu_custom_call.1}
  #allocation0 [shape = 'u32[]', space=smem, size = 0x4, offset = 0x4, fixed_abs, tag = 'smem constant byte address 0x4 - core index']
  #allocation1 [shape = 'u32[144,128]{1,0:T(1,128)}', space=vmem, size = 0x12000, scoped, tag = 'internal scratch']
  %s0 = inlined_call_operand.hbm [shape: f32[2,8,128], index: 0, kind: input, shape index: {}]
  %s1 = inlined_call_operand.hbm [shape: f32[2,8,128], index: 1, kind: input, shape index: {}]
  %s2 = inlined_call_operand.hbm [shape: f32[8,128], index: 2, kind: output, shape index: {}]
  %s3 = sld [smem:[#allocation0]]
  $region30: #{tpu_custom_call.1} parent=0
    _
  %s5 = ssub.s32 1, %s3
  %s6 = scalar_select 0, %s5, %s3
  $region1: #{tpu_custom_call.1} parent=0
    #allocation2 [shape = 'u8[8192]{0}', space=vmem, size = 0x2000, scoped, tag = 'input window, operand 0, single buffered']
    #allocation3 [shape = 's32[1]{0}', space=sflag, size = 0x4, scoped, tag = 'scoped memory for tpu_custom_call.1']
    #allocation4 [shape = 's32[1]{0}', space=sflag, size = 0x4, scoped, tag = 'scoped memory for tpu_custom_call.1']
    #allocation5 [shape = 'u8[8192]{0}', space=vmem, size = 0x2000, scoped, tag = 'input window, operand 1, single buffered']
    #allocation6 [shape = 's32[1]{0}', space=sflag, size = 0x4, scoped, tag = 'scoped memory for tpu_custom_call.1']
    #allocation7 [shape = 'u8[4096]{0}', space=vmem, size = 0x1000, scoped, tag = 'output window, operand 0, single buffered']
    %7 = vsyncpa [#allocation3], 0
    %8 = vsyncpa [#allocation6], 0
    %9 = vsyncpa [#allocation4], 0
    // Predicated region
    $region2: #{tpu_custom_call.1} parent=1 // pred_check
      _
    $region3: #{tpu_custom_call.1} parent=1 // pred_check_branch
      %11 = sbr.rel (0) target = $region5
    $region4: #{tpu_custom_call.1} parent=1 // pred_region
      %s12 = sadd.s32 0, 0
      %s13 = smul.u32 2, %s12
      %s15 = ssub.s32 256, 256
      %16 = vsyncadd [#allocation3], %s15
      %s17 = smul.addr %s13, 128
      %s18 = scalar_lea.hbm %s0, %s17
      %s19 = sshll.u32 [#allocation2], 4
      %s20 = int_to_ptr.vmem [resolvable:$true] %s19
      %25 = dma.hbm_to_vmem [thread:$0]  %s18, 256, %s20, [#allocation3], 128, 128, 8
    $region5: #{tpu_custom_call.1} parent=1 // pred_fallthru
      _
    // Predicated region
    $region6: #{tpu_custom_call.1} parent=1 // pred_check
      _
    $region7: #{tpu_custom_call.1} parent=1 // pred_check_branch
      %27 = sbr.rel (0) target = $region9
    $region8: #{tpu_custom_call.1} parent=1 // pred_region
      %s28 = sadd.s32 0, 0
      %s29 = smul.u32 2, %s28
      %s31 = ssub.s32 256, 256
      %32 = vsyncadd [#allocation6], %s31
      %s33 = smul.addr %s29, 128
      %s34 = scalar_lea.hbm %s1, %s33
      %s35 = sshll.u32 [#allocation5], 4
      %s36 = int_to_ptr.vmem [resolvable:$true] %s35
      %41 = dma.hbm_to_vmem [thread:$0]  %s34, 256, %s36, [#allocation6], 128, 128, 8
    $region9: #{tpu_custom_call.1} parent=1 // pred_fallthru
      _
    // Predicated region
    $region10: #{tpu_custom_call.1} parent=1 // pred_check
      _
    $region11: #{tpu_custom_call.1} parent=1 // pred_check_branch
      %43 = sbr.rel (0) target = $region13
    $region12: #{tpu_custom_call.1} parent=1 // pred_region
      %44 = dma.done [#allocation3], 256
    $region13: #{tpu_custom_call.1} parent=1 // pred_fallthru
      _
    // Predicated region
    $region14: #{tpu_custom_call.1} parent=1 // pred_check
      _
    $region15: #{tpu_custom_call.1} parent=1 // pred_check_branch
      %46 = sbr.rel (0) target = $region17
    $region16: #{tpu_custom_call.1} parent=1 // pred_region
      %47 = dma.done [#allocation6], 256
    $region17: #{tpu_custom_call.1} parent=1 // pred_fallthru
      _
    %s48 = sadd.s32 0, 0
    %s49 = smul.u32 2, %s48
    %s50 = sadd.s32 0, 0
    %s51 = smul.u32 2, %s50
    %p52 = scmp.eq.s32.totalorder 0, 0
    // Predicated region
    $region18: #{tpu_custom_call.1} parent=1 // pred_check
      %p53 = pneg %p52
    $region19: #{tpu_custom_call.1} parent=1 // pred_check_branch
      %55 = sbr.rel (%p53) target = $region21
    $region20: #{tpu_custom_call.1} parent=1 // pred_region
      %56 = vst [vmem:[#allocation7] sm:$0xff] 0.0
    $region21: #{tpu_custom_call.1} parent=1 // pred_fallthru
      _
    %v57 = vld [vmem:[#allocation2] sm:$0xff]
    %v58 = vld [vmem:[#allocation2 + $0x8] sm:$0xff]
    %v59 = vld [vmem:[#allocation5] sm:$0xff]
    %v60 = vld [vmem:[#allocation5 + $0x8] sm:$0xff]
    %v61 = vsub.f32 %v57, %v59
    %v62 = vsub.f32 %v58, %v60
    %v63 = vld [vmem:[#allocation7] sm:$0xff]
    %v64 = vmul.f32 %v61, %v61
    %v65 = vmul.f32 %v62, %v62
    %v66 = vadd.f32 %v64, %v65
    %v67 = vadd.f32 %v63, %v66
    %68 = vst [vmem:[#allocation7] sm:$0xff] %v67
    // Predicated region
    $region22: #{tpu_custom_call.1} parent=1 // pred_check
      _
    $region23: #{tpu_custom_call.1} parent=1 // pred_check_branch
      %70 = sbr.rel (0) target = $region25
    $region24: #{tpu_custom_call.1} parent=1 // pred_region
      %s72 = ssub.s32 128, 128
      %73 = vsyncadd [#allocation4], %s72
      %s75 = sshll.u32 [#allocation7], 4
      %s76 = int_to_ptr.vmem [resolvable:$true] %s75
      %78 = dma.vmem_to_hbm [thread:$0]  %s76, 128, %s2, [#allocation4]
    $region25: #{tpu_custom_call.1} parent=1 // pred_fallthru
      _
    // Predicated region
    $region26: #{tpu_custom_call.1} parent=1 // pred_check
      _
    $region27: #{tpu_custom_call.1} parent=1 // pred_check_branch
      %80 = sbr.rel (0) target = $region29
    $region28: #{tpu_custom_call.1} parent=1 // pred_region
      %81 = dma.done [#allocation4], 128
    $region29: #{tpu_custom_call.1} parent=1 // pred_fallthru
      _
    %82 = vsyncpa [#allocation3], 1
    %83 = vsyncpa [#allocation6], 1
    %84 = vsyncpa [#allocation4], 1

</llo_original>
